<compile_context>
chip_gen: v7x
topology: tpu7x:2x2x1
jax: 0.10.0
libtpu: 0.0.40
codegen_flags: <defaults>
</compile_context>

<pallas_src>
import math
import functools

import jax
import jax.numpy as jnp
from jax.experimental import pallas as pl
from jax.experimental.pallas import tpu as pltpu


# --------------------------------------------------------------------------------------
# Kernels
# --------------------------------------------------------------------------------------
def _pad_block_kernel(x_ref, o_ref, *, pad_top, pad_left):
    """General path: x_ref (B, in_h, in_w) -> o_ref (B, out_h, out_w), single full store."""
    b, out_h, out_w = o_ref.shape
    _, in_h, in_w = x_ref.shape
    pad_bottom = out_h - pad_top - in_h
    pad_right = out_w - pad_left - in_w
    dt = o_ref.dtype

    x = x_ref[...]

    # Pad along W (lane dim) in registers.
    if pad_left > 0 or pad_right > 0:
        parts = []
        if pad_left > 0:
            parts.append(jnp.zeros((b, in_h, pad_left), dt))
        parts.append(x)
        if pad_right > 0:
            parts.append(jnp.zeros((b, in_h, pad_right), dt))
        x = jnp.concatenate(parts, axis=2)

    # Pad along H (sublane dim) in registers.
    if pad_top > 0 or pad_bottom > 0:
        parts = []
        if pad_top > 0:
            parts.append(jnp.zeros((b, pad_top, out_w), dt))
        parts.append(x)
        if pad_bottom > 0:
            parts.append(jnp.zeros((b, pad_bottom, out_w), dt))
        x = jnp.concatenate(parts, axis=1)

    # Single offset-0, full-width, unmasked store.
    o_ref[...] = x


def _pad_flat_kernel(x_ref, o_ref, *, lead, trail):
    """H-only padding with (H,W) flattened: lane-dense last dim regardless of out_w."""
    b, _ = o_ref.shape
    dt = o_ref.dtype
    x = x_ref[...]
    parts = []
    if lead > 0:
        parts.append(jnp.zeros((b, lead), dt))
    parts.append(x)
    if trail > 0:
        parts.append(jnp.zeros((b, trail), dt))
    o_ref[...] = jnp.concatenate(parts, axis=1)


# --------------------------------------------------------------------------------------
# Helpers
# --------------------------------------------------------------------------------------
def _round_up(v, m):
    return ((v + m - 1) // m) * m


def _tiled_bytes(shape, itemsize, sub):
    """VMEM footprint of a block: last two dims padded to (sublane, 128) tiles."""
    *lead, s, l = shape
    lead_n = 1
    for d in lead:
        lead_n *= int(d)
    return lead_n * _round_up(int(s), sub) * _round_up(int(l), 128) * itemsize


def _vmem_capacity_bytes():
    try:
        info = pltpu.get_tpu_info()
        cap = getattr(info, "vmem_capacity_bytes", None)
        if cap:
            return int(cap)
    except Exception:
        pass
    return 64 * 1024 * 1024  # conservative: v7x per-TC VMEM


def _choose_block(planes, pair_bytes_fn, pair_budget, min_steps, extra_ok=None):
    """Largest divisor of `planes` giving >= min_steps grid steps and fitting the budget."""
    cap = planes // min_steps if planes >= min_steps else planes
    cap = max(1, min(cap, planes))
    d = cap
    while d >= 1:
        if (planes % d == 0 and pair_bytes_fn(d) <= pair_budget
                and (extra_ok is None or extra_ok(d))):
            return d
        d -= 1
    return None


# --------------------------------------------------------------------------------------
# Public wrapper: exact re-implementation of Padding2D.forward for NCHW inputs.
# --------------------------------------------------------------------------------------
def padding2d(x, kernel_size, stride, padding="SAME"):
    if isinstance(stride, int):
        stride = (stride, stride)
    if isinstance(kernel_size, int):
        kernel_size = (kernel_size, kernel_size)
    if padding not in ("SAME", "VALID"):
        raise ValueError("padding must be 'SAME' or 'VALID'")
    if padding == "VALID":
        return x

    n, c, height, width = x.shape
    stride_h, stride_w = stride
    kernel_h, kernel_w = kernel_size

    out_height = math.ceil(height / stride_h)
    out_width = math.ceil(width / stride_w)
    wanted_h = (out_height - 1) * stride_h + kernel_h
    wanted_w = (out_width - 1) * stride_w + kernel_w
    pad_h = wanted_h - height
    pad_w = wanted_w - width
    pad_top = pad_h // 2 + pad_h % 2
    pad_down = pad_h - pad_top
    pad_left = pad_w // 2 + pad_w % 2
    pad_right = pad_w - pad_left

    # No padding/cropping at all -> identity.
    if pad_top == 0 and pad_down == 0 and pad_left == 0 and pad_right == 0:
        return x

    out_h = height + pad_top + pad_down
    out_w = width + pad_left + pad_right
    if out_h <= 0 or out_w <= 0:
        # Fully cropped away (degenerate); matches F.pad's empty result.
        return jnp.zeros((n, c, max(out_h, 0), max(out_w, 0)), x.dtype)

    # F.pad with negative values crops; fold negative pads into an input crop so the
    # Pallas kernel only handles non-negative zero padding.
    crop_top = max(0, -pad_top)
    crop_down = max(0, -pad_down)
    crop_left = max(0, -pad_left)
    crop_right = max(0, -pad_right)
    x_c = x[:, :, crop_top:height - crop_down, crop_left:width - crop_right]
    in_h = height - crop_top - crop_down
    in_w = width - crop_left - crop_right
    p_top = max(0, pad_top)
    p_down = max(0, pad_down)
    p_left = max(0, pad_left)
    p_right = max(0, pad_right)

    if in_h <= 0 or in_w <= 0:
        # Input cropped to nothing -> output is all zeros.
        return jnp.zeros((n, c, out_h, out_w), x.dtype)

    if p_top == 0 and p_down == 0 and p_left == 0 and p_right == 0:
        # Pure crop -> a slice is the zero-cost path; no kernel needed.
        return x_c

    planes = n * c
    itemsize = jnp.dtype(x.dtype).itemsize
    sub = max(8, 32 // itemsize)  # sublane packing: 8 f32, 16 bf16, 32 int8

    # --- Per-generation VMEM budget (tiled, double-buffered pair of in+out blocks) -------
    vmem_cap = _vmem_capacity_bytes()
    if vmem_cap <= 72 * 1024 * 1024:          # v7x-class: 64 MiB/TC, 2 TCs
        pair_budget = 40 * 1024 * 1024
        min_steps = 4                          # >= 2 overlapped steps per TensorCore
        vmem_limit = 56 * 1024 * 1024
    else:                                      # v5e/v6e-class: 128 MiB, 1 TC
        pair_budget = 64 * 1024 * 1024
        min_steps = 3                          # keep DMA-in(i+1) overlapped with WB(i-1)
        vmem_limit = 96 * 1024 * 1024

    def pair_bytes_3d(bb):
        return 2 * (_tiled_bytes((bb, in_h, in_w), itemsize, sub)
                    + _tiled_bytes((bb, out_h, out_w), itemsize, sub))

    def pair_bytes_flat(bb):
        return 2 * (_tiled_bytes((bb, in_h * in_w), itemsize, sub)
                    + _tiled_bytes((bb, out_h * out_w), itemsize, sub))

    cp = pltpu.CompilerParams(dimension_semantics=("parallel",),
                              vmem_limit_bytes=vmem_limit)

    # --- Lane-dense flat path: only H padded -> flatten (H,W) so the lane dim is large ---
    if p_left == 0 and p_right == 0:
        b_flat = _choose_block(planes, pair_bytes_flat, pair_budget, min_steps,
                               extra_ok=lambda d: d % 8 == 0 or d == planes)
        if b_flat is not None:
            x_in = x_c.reshape(planes, in_h * in_w)
            kernel = functools.partial(_pad_flat_kernel,
                                       lead=p_top * out_w, trail=p_down * out_w)
            out_flat = pl.pallas_call(
                kernel,
                out_shape=jax.ShapeDtypeStruct((planes, out_h * out_w), x.dtype),
                grid=(planes // b_flat,),
                in_specs=[pl.BlockSpec((b_flat, in_h * in_w), lambda i: (i, 0))],
                out_specs=pl.BlockSpec((b_flat, out_h * out_w), lambda i: (i, 0)),
                compiler_params=cp,
            )(x_in)
            return out_flat.reshape(n, c, out_h, out_w)

    # --- General path: many whole planes per block, single full-block store --------------
    # TODO(synk): for out_w << 128 with W padding, pack G=floor(128/out_w) planes along the
    # lane dim (wrapper-side reshape) for full lane utilization.
    b = _choose_block(planes, pair_bytes_3d, pair_budget, min_steps)
    if b is None:
        # A single plane pair exceeds the VMEM budget (huge feature map).
        # TODO(synk): tile within a plane (H-blocked Pallas kernel) for very large maps.
        return jnp.pad(x_c, ((0, 0), (0, 0), (p_top, p_down), (p_left, p_right)))

    x_in = x_c.reshape(planes, in_h, in_w)
    kernel = functools.partial(_pad_block_kernel, pad_top=p_top, pad_left=p_left)
    out3 = pl.pallas_call(
        kernel,
        out_shape=jax.ShapeDtypeStruct((planes, out_h, out_w), x.dtype),
        grid=(planes // b,),
        in_specs=[pl.BlockSpec((b, in_h, in_w), lambda i: (i, 0, 0))],
        out_specs=pl.BlockSpec((b, out_h, out_w), lambda i: (i, 0, 0)),
        compiler_params=cp,
    )(x_in)
    return out3.reshape(n, c, out_h, out_w)


# --------------------------------------------------------------------------------------
# Self-test
# --------------------------------------------------------------------------------------
if __name__ == "__main__":
    def ref_padding2d(x, kernel_size, stride, padding="SAME"):
        if isinstance(stride, int):
            stride = (stride, stride)
        if isinstance(kernel_size, int):
            kernel_size = (kernel_size, kernel_size)
        if padding == "VALID":
            return x
        _, _, h, w = x.shape
        sh, sw = stride
        kh, kw = kernel_size
        oh, ow = math.ceil(h / sh), math.ceil(w / sw)
        ph = (oh - 1) * sh + kh - h
        pw = (ow - 1) * sw + kw - w
        pt = ph // 2 + ph % 2
        pd = ph - pt
        pleft = pw // 2 + pw % 2
        pright = pw - pleft
        # F.pad semantics: negative pads crop.
        ct, cd = max(0, -pt), max(0, -pd)
        cl, cr = max(0, -pleft), max(0, -pright)
        xc = x[:, :, ct:h - cd, cl:w - cr]
        return jnp.pad(xc, ((0, 0), (0, 0),
                            (max(0, pt), max(0, pd)),
                            (max(0, pleft), max(0, pright))))

    key = jax.random.PRNGKey(0)
    x = jax.random.normal(key, (2, 4, 16, 16), dtype=jnp.float32)

    # 1) SAME, k=3 s=2: pads one zero row/col at top/left -> (2,4,17,17). General 3D path.
    out = jax.block_until_ready(padding2d(x, kernel_size=3, stride=2, padding="SAME"))
    ref = ref_padding2d(x, 3, 2, "SAME")
    assert out.shape == ref.shape == (2, 4, 17, 17), (out.shape, ref.shape)
    assert jnp.array_equal(out, ref), "mismatch (SAME, k=3 s=2)"

    # 2) SAME, k=1 s=2: pure crop of last row/col -> (2,4,15,15). Crop-only fast path.
    out2 = jax.block_until_ready(padding2d(x, kernel_size=1, stride=2, padding="SAME"))
    ref2 = ref_padding2d(x, 1, 2, "SAME")
    assert out2.shape == ref2.shape == (2, 4, 15, 15), (out2.shape, ref2.shape)
    assert jnp.array_equal(out2, ref2), "mismatch (SAME, k=1 s=2 crop)"

    # 3) H-only pad on odd H: exercises the general kernel with W unpadded.
    x3 = jax.random.normal(jax.random.PRNGKey(1), (2, 4, 15, 16), dtype=jnp.float32)
    out3 = jax.block_until_ready(padding2d(x3, kernel_size=2, stride=2, padding="SAME"))
    ref3 = ref_padding2d(x3, 2, 2, "SAME")
    assert out3.shape == ref3.shape == (2, 4, 16, 16), (out3.shape, ref3.shape)
    assert jnp.array_equal(out3, ref3), "mismatch (SAME, k=2 s=2, H-only pad)"

    # 4) H-only pad with enough planes to take the lane-dense flat path.
    x4 = jax.random.normal(jax.random.PRNGKey(2), (2, 16, 15, 16), dtype=jnp.float32)
    out4 = jax.block_until_ready(padding2d(x4, kernel_size=2, stride=2, padding="SAME"))
    ref4 = ref_padding2d(x4, 2, 2, "SAME")
    assert out4.shape == ref4.shape == (2, 16, 16, 16), (out4.shape, ref4.shape)
    assert jnp.array_equal(out4, ref4), "mismatch (SAME, flat H-only pad)"

    # 5) bf16 input through the general path.
    xb = x.astype(jnp.bfloat16)
    outb = jax.block_until_ready(padding2d(xb, kernel_size=3, stride=2, padding="SAME"))
    refb = ref_padding2d(xb, 3, 2, "SAME")
    assert outb.shape == refb.shape and jnp.array_equal(outb, refb), "mismatch (bf16)"

    # 6) VALID path is identity.
    out_valid = padding2d(x, kernel_size=3, stride=2, padding="VALID")
    assert out_valid.shape == x.shape

    print("KERNEL_OK")
</pallas_src>

<mosaic_0001>
module attributes {stable_mosaic.version = 11 : i64} {
  func.func @_pad_block_kernel(%arg0: i32, %arg1: memref<2x16x16xf32, #tpu.memory_space<vmem>>, %arg2: memref<2x17x17xf32, #tpu.memory_space<vmem>>) attributes {dimension_semantics = [#tpu.dimension_semantics<parallel>], iteration_bounds = array<i64: 4>, scalar_prefetch = 0 : i64, scratch_operands = 0 : i64, tpu.core_type = #tpu.core_type<tc>, window_params = [{transform_indices = @transform_0, window_bounds = array<i64: 2, 16, 16>}, {transform_indices = @transform_1, window_bounds = array<i64: 2, 17, 17>}]} {
    %c0 = arith.constant 0 : index
    %c0_0 = arith.constant 0 : index
    %c0_1 = arith.constant 0 : index
    %0 = vector.load %arg1[%c0, %c0_0, %c0_1] : memref<2x16x16xf32, #tpu.memory_space<vmem>>, vector<2x16x16xf32>
    %cst = arith.constant 0.000000e+00 : f32
    %1 = vector.broadcast %cst : f32 to vector<2x16x1xf32>
    %2 = tpu.concatenate %1, %0 in 2 : vector<2x16x1xf32>, vector<2x16x16xf32> -> vector<2x16x17xf32>
    %cst_2 = arith.constant 0.000000e+00 : f32
    %3 = vector.broadcast %cst_2 : f32 to vector<2x1x17xf32>
    %4 = tpu.concatenate %3, %2 in 1 : vector<2x1x17xf32>, vector<2x16x17xf32> -> vector<2x17x17xf32>
    %c0_3 = arith.constant 0 : index
    %c0_4 = arith.constant 0 : index
    %c0_5 = arith.constant 0 : index
    %5 = vector.load %arg2[%c0_3, %c0_4, %c0_5] : memref<2x17x17xf32, #tpu.memory_space<vmem>>, vector<2x17x17xf32>
    tpu.vector_store %arg2[%c0_3, %c0_4, %c0_5], %4 {strides = array<i32>} : memref<2x17x17xf32, #tpu.memory_space<vmem>>, vector<2x17x17xf32>,
    return
  }
  func.func @transform_0(%arg0: i32) -> (i32, i32, i32) {
    %c0_i32 = arith.constant 0 : i32
    %c0_i32_0 = arith.constant 0 : i32
    %c0_i32_1 = arith.constant 0 : i32
    return %arg0, %c0_i32, %c0_i32_0 : i32, i32, i32
  }
  func.func @transform_1(%arg0: i32) -> (i32, i32, i32) {
    %c0_i32 = arith.constant 0 : i32
    %c0_i32_0 = arith.constant 0 : i32
    %c0_i32_1 = arith.constant 0 : i32
    return %arg0, %c0_i32, %c0_i32_0 : i32, i32, i32
  }
}

</mosaic_0001>

<llo_original>
// kernel: tpu_custom_call.1
$region0: #{tpu_custom_call.1}
  #allocation0 [shape = 'u32[]', space=smem, size = 0x4, offset = 0x4, fixed_abs, tag = 'smem constant byte address 0x4 - core index']
  #allocation1 [shape = 'u32[144,128]{1,0:T(1,128)}', space=vmem, size = 0x12000, scoped, tag = 'internal scratch']
  %s0 = inlined_call_operand.hbm [shape: f32[8,16,16], index: 0, kind: input, shape index: {}]
  %s1 = inlined_call_operand.vmem [shape: f32[8,17,17], index: 1, kind: output, shape index: {}]
  %s2 = sld [smem:[#allocation0]]
  $region41: #{tpu_custom_call.1} parent=0
    _
  %s4 = ssub.s32 1, %s2
  %s5 = scalar_select 0, %s4, %s2
  $region1: #{tpu_custom_call.1} parent=0
    #allocation2 [shape = 'u8[32768]{0}', space=vmem, size = 0x8000, scoped, tag = 'input window, operand 0']
    #allocation3 [shape = 's32[2]{0}', space=sflag, size = 0x8, scoped, tag = 'scoped memory for tpu_custom_call.1']
    %6 = vsyncpa [#allocation3], 0
    %s7 = scalar_lea.sflag [#allocation3], 1
    %8 = vsyncpa %s7, 0
    loop: start=0, step=1, limit=6
    $region2: #{tpu_custom_call.1} parent=1 // loop_pre_header
      _
    $region3: #{tpu_custom_call.1} parent=1 // loop_header
      %s10 = sphi 0, %s14
      %p11 = scmp.ge.s32.totalorder %s10, 6
      %s20 = sphi 0, %s22
      %s23 = sphi 0, %s20
      %s24 = sphi 0, %s23
      %s40 = sphi 0, %s24
      %s46 = sphi 0, %s48
      %s49 = sphi 0, %s46
      %s50 = sphi 0, %s49
      %s66 = sphi 0, %s50
    $region4: #{tpu_custom_call.1} parent=1 // loop_header_branch
      %13 = sbr.rel (%p11) target = $region8
    $region5: #{tpu_custom_call.1} parent=1 // loop_body
      %s15 = ssub.s32 %s10, 1
      %s16 = ssub.s32 %s10, 2
      %s17 = sadd.s32 %s10, 1
      %s18 = ssub.s32 %s10, %s17
      %p19 = scmp.eq.s32.totalorder %s18, 0
      %s21 = sadd.s32 %s20, 1
      %s22 = scalar_select %p19, %s20, %s21
      %p25 = pneg %p19
      %p26 = scmp.eq.s32.totalorder %s10, 3
      %p27 = por %p25, %p26
      %p28 = scmp.ne.s32.totalorder %s20, %s23
      %p29 = scmp.eq.s32.totalorder %s10, 0
      %p30 = por %p28, %p29
      %p31 = scmp.ne.s32.totalorder %s20, %s23
      %p32 = scmp.eq.s32.totalorder %s15, 3
      %p33 = por %p31, %p32
      %p34 = scmp.ne.s32.totalorder %s23, %s24
      %p35 = scmp.eq.s32.totalorder %s15, 0
      %p36 = por %p34, %p35
      %p37 = scmp.ne.s32.totalorder %s23, %s24
      %p38 = scmp.eq.s32.totalorder %s16, 3
      %p39 = por %p37, %p38
      %p41 = scmp.ne.s32.totalorder %s24, %s40
      %p42 = scmp.eq.s32.totalorder %s16, 0
      %p43 = por %p41, %p42
      %s44 = ssub.s32 %s10, %s17
      %p45 = scmp.eq.s32.totalorder %s44, 0
      %s47 = sadd.s32 %s46, 1
      %s48 = scalar_select %p45, %s46, %s47
      %p51 = pneg %p45
      %p52 = scmp.eq.s32.totalorder %s10, 3
      %p53 = por %p51, %p52
      %p54 = scmp.ne.s32.totalorder %s46, %s49
      %p55 = scmp.eq.s32.totalorder %s10, 0
      %p56 = por %p54, %p55
      %p57 = scmp.ne.s32.totalorder %s46, %s49
      %p58 = scmp.eq.s32.totalorder %s15, 3
      %p59 = por %p57, %p58
      %p60 = scmp.ne.s32.totalorder %s49, %s50
      %p61 = scmp.eq.s32.totalorder %s15, 0
      %p62 = por %p60, %p61
      %p63 = scmp.ne.s32.totalorder %s49, %s50
      %p64 = scmp.eq.s32.totalorder %s16, 3
      %p65 = por %p63, %p64
      %p67 = scmp.ne.s32.totalorder %s50, %s66
      %p68 = scmp.eq.s32.totalorder %s16, 0
      %p69 = por %p67, %p68
      %p70 = scmp.le.s32.totalorder 1, %s10
      %p71 = scmp.lt.s32.totalorder %s10, 5
      %p72 = pnand %p70, %p71
      %p73 = pneg %p72
      // Predicated region
      $region9: #{tpu_custom_call.1} parent=5 // pred_check
        _
      $region10: #{tpu_custom_call.1} parent=5 // pred_check_branch
        %75 = sbr.rel (%p72) target = $region12
      $region11: #{tpu_custom_call.1} parent=5 // pred_region
        %s76 = ssub.s32 %s10, 1
      $region12: #{tpu_custom_call.1} parent=5 // pred_fallthru
        _
      %p77 = scmp.lt.s32.totalorder %s10, 4
      // Predicated region
      $region13: #{tpu_custom_call.1} parent=5 // pred_check
        %p78 = pneg %p77
      $region14: #{tpu_custom_call.1} parent=5 // pred_check_branch
        %80 = sbr.rel (%p78) target = $region16
      $region15: #{tpu_custom_call.1} parent=5 // pred_region
        // Predicated region
        $region17: #{tpu_custom_call.1} parent=15 // pred_check
          %p81 = pneg %p30
        $region18: #{tpu_custom_call.1} parent=15 // pred_check_branch
          %83 = sbr.rel (%p81) target = $region20
        $region19: #{tpu_custom_call.1} parent=15 // pred_region
          %s84 = sand.u32 %s20, 1
          %s85 = scalar_lea.sflag [#allocation3], %s84
          %s86 = sand.u32 %s20, 1
          %s87 = smul.addr %s86, 32
          %s88 = scalar_lea.vmem [#allocation2], %s87
          %s89 = smul.u32 2, %s10
          %s91 = ssub.s32 512, 512
          %92 = vsyncadd %s85, %s91
          %s93 = smul.addr %s89, 2
          %s94 = smul.addr %s93, 128
          %s95 = scalar_lea.hbm %s0, %s94
          %s96 = sshll.u32 %s88, 4
          %s97 = int_to_ptr.vmem [resolvable:$true] %s96
          %102 = dma.hbm_to_vmem [thread:$0]  %s95, 512, %s97, %s85, 128, 128, 8
        $region20: #{tpu_custom_call.1} parent=15 // pred_fallthru
          _
      $region16: #{tpu_custom_call.1} parent=5 // pred_fallthru
        _
      %p103 = scmp.le.s32.totalorder 1, %s10
      %p104 = scmp.lt.s32.totalorder %s10, 5
      %p105 = pnand %p103, %p104
      %p106 = pneg %p105
      // Predicated region
      $region21: #{tpu_custom_call.1} parent=5 // pred_check
        _
      $region22: #{tpu_custom_call.1} parent=5 // pred_check_branch
        %108 = sbr.rel (%p105) target = $region24
      $region23: #{tpu_custom_call.1} parent=5 // pred_region
        %s109 = ssub.s32 %s10, 1
        %s110 = sand.u32 %s23, 1
        %s111 = scalar_lea.sflag [#allocation3], %s110
        %s112 = sand.u32 %s23, 1
        %s113 = smul.addr %s112, 32
        %s114 = scalar_lea.vmem [#allocation2], %s113
        // Predicated region
        $region25: #{tpu_custom_call.1} parent=23 // pred_check
          %p115 = pneg %p36
        $region26: #{tpu_custom_call.1} parent=23 // pred_check_branch
          %117 = sbr.rel (%p115) target = $region28
        $region27: #{tpu_custom_call.1} parent=23 // pred_region
          %118 = dma.done %s111, 512
        $region28: #{tpu_custom_call.1} parent=23 // pred_fallthru
          _
        %s119 = sand.u32 %s23, 1
        %s120 = scalar_lea.sflag [#allocation3], %s119
        %s121 = sand.u32 %s23, 1
        %s122 = smul.addr %s121, 32
        %s123 = scalar_lea.vmem [#allocation2], %s122
        %p124 = pneg %p36
        %p125 = pneg %p33
        %p126 = pneg %p62
        %p127 = pneg %p59
        %s128 = smul.u32 2, %s15
        %p129 = scmp.lt.s32.totalorder %s128, 7
        %s130 = scalar_select %p129, %s128, 7
        %s131 = smul.addr %s130, 3
        %s132 = smul.addr %s131, 8
        %s133 = scalar_lea.vmem %s1, %s132
        %s134 = smul.u32 2, %s15
        %s135 = smul.u32 2, %s15
        %p136 = scmp.lt.s32.totalorder %s135, 7
        %s137 = scalar_select %p136, %s135, 7
        %s138 = smul.addr %s137, 3
        %s139 = smul.addr %s138, 8
        %s140 = scalar_lea.vmem %s1, %s139
        %s141 = smul.u32 2, %s15
        %v142 = vld [vmem:[%s114] sm:$0xff]
        %v143 = vld [vmem:[%s114 + $0x8] sm:$0xff]
        %v144 = vld [vmem:[%s114 + $0x10] sm:$0xff]
        %v145 = vld [vmem:[%s114 + $0x18] sm:$0xff]
        %150 = vrot.lane.b32.xlu0 %v142, 1
        %v151 = vpop.permute.xlu0 %150
        %152 = vrot.lane.b32.xlu0 %v143, 1
        %v153 = vpop.permute.xlu0 %152
        %154 = vrot.lane.b32.xlu0 %v144, 1
        %v155 = vpop.permute.xlu0 %154
        %156 = vrot.lane.b32.xlu0 %v145, 1
        %v157 = vpop.permute.xlu0 %156
        %vm162 = vcmask 7168
        %v163 = vsel %vm162, 0.0, %v151
        %v164 = vsel %vm162, 0.0, %v153
        %v165 = vsel %vm162, 0.0, %v155
        %v166 = vsel %vm162, 0.0, %v157
        %vm171 = vcmask 1040384
        %v172 = vrot.slane %v163, 7
        %v173 = vrot.slane %v164, 7
        %v174 = vsel %vm171, %v172, %v173
        %v175 = vrot.slane %v165, 7
        %v176 = vrot.slane %v166, 7
        %v177 = vsel %vm171, %v175, %v176
        %v184 = vsel %vm171, 0.0, %v172
        %v185 = vsel %vm171, 0.0, %v175
        %vm186 = vcmask 138240
        %187 = vst.msk [vmem:[%s140] sm:$0xff] %vm186, %v184
        %188 = vst.msk [vmem:[%s140 + $0x8] sm:$0xff] %vm186, %v174
        %vm189 = vcmask 131072
        %190 = vst.msk [vmem:[%s140 + $0x10] sm:$0x1] %vm189, %v173
        %191 = vst.msk [vmem:[%s140 + $0x18] sm:$0xff] %vm186, %v185
        %192 = vst.msk [vmem:[%s140 + $0x20] sm:$0xff] %vm186, %v177
        %193 = vst.msk [vmem:[%s140 + $0x28] sm:$0x1] %vm189, %v176
        %s194 = smul.u32 2, %s15
        %p195 = scmp.lt.s32.totalorder %s194, 7
        %s196 = scalar_select %p195, %s194, 7
        %s197 = smul.addr %s196, 3
        %s198 = smul.addr %s197, 8
        %s199 = scalar_lea.vmem %s1, %s198
        // Predicated region
        $region29: #{tpu_custom_call.1} parent=23 // pred_check
          %p200 = pneg %p59
        $region30: #{tpu_custom_call.1} parent=23 // pred_check_branch
          %202 = sbr.rel (%p200) target = $region32
        $region31: #{tpu_custom_call.1} parent=23 // pred_region
          %s203 = smul.u32 2, %s15
        $region32: #{tpu_custom_call.1} parent=23 // pred_fallthru
          _
      $region24: #{tpu_custom_call.1} parent=5 // pred_fallthru
        _
      %p204 = scmp.le.s32.totalorder 2, %s10
      // Predicated region
      $region33: #{tpu_custom_call.1} parent=5 // pred_check
        %p205 = pneg %p204
      $region34: #{tpu_custom_call.1} parent=5 // pred_check_branch
        %207 = sbr.rel (%p205) target = $region36
      $region35: #{tpu_custom_call.1} parent=5 // pred_region
        %s208 = ssub.s32 %s10, 2
        // Predicated region
        $region37: #{tpu_custom_call.1} parent=35 // pred_check
          %p209 = pneg %p65
        $region38: #{tpu_custom_call.1} parent=35 // pred_check_branch
          %211 = sbr.rel (%p209) target = $region40
        $region39: #{tpu_custom_call.1} parent=35 // pred_region
          %s212 = smul.u32 2, %s16
          %p213 = scmp.lt.s32.totalorder %s212, 7
          %s214 = scalar_select %p213, %s212, 7
          %s215 = smul.addr %s214, 3
          %s216 = smul.addr %s215, 8
          %s217 = scalar_lea.vmem %s1, %s216
        $region40: #{tpu_custom_call.1} parent=35 // pred_fallthru
          _
      $region36: #{tpu_custom_call.1} parent=5 // pred_fallthru
        _
    $region6: #{tpu_custom_call.1} parent=1 // loop_footer
      %s14 = sadd.s32 1, %s10
    $region7: #{tpu_custom_call.1} parent=1 // loop_footer_branch
      %9 = sbr.rel target = $region3
    $region8: #{tpu_custom_call.1} parent=1 // loop_exit
      _
    %218 = vsyncpa [#allocation3], 1
    %s219 = scalar_lea.sflag [#allocation3], 1
    %220 = vsyncpa %s219, 1

</llo_original>
